<compile_context>
chip_gen: v7x
topology: tpu7x:2x2x1
jax: 0.10.0
libtpu: 0.0.40
codegen_flags: <defaults>
</compile_context>

<pallas_src>
import functools

import jax
import jax.numpy as jnp
from jax.experimental import pallas as pl
from jax.experimental.pallas import tpu as pltpu

_LANE = 128
_MAX_ROW_TILE = 4096   # 4096 * 128 * 4B = 2 MiB per f32 input block
_NUM_CORES = 2         # megacore split (v7x); no-op sharding on 1-TC chips


def _round_up(x, m):
    return ((x + m - 1) // m) * m


def _make_mae_kernel(rows, row_tile, blocks_per_core):
    """Kernel: per-core lane-dense accumulation of sum(|x - y|)."""

    def kernel(x_ref, y_ref, o_ref):
        c = pl.program_id(0)   # core split ("parallel")
        i = pl.program_id(1)   # streaming axis ("arbitrary"), o_ref resident across it

        @pl.when(i == 0)
        def _init():
            o_ref[...] = jnp.zeros_like(o_ref)

        # Logical (unclamped) position of this block in the row dimension.  Blocks whose
        # logical start is past the real array (clamped duplicates / partial tail) are
        # zeroed by the row mask, so they contribute nothing.
        row_start = (c * blocks_per_core + i) * row_tile
        local_row = jax.lax.broadcasted_iota(jnp.int32, (row_tile, _LANE), 0)
        valid = (row_start + local_row) < rows

        d = jnp.abs(x_ref[...].astype(jnp.float32) - y_ref[...].astype(jnp.float32))
        d = jnp.where(valid, d, 0.0)

        # (row_tile, 128) -> (row_tile//8, 8, 128) is vreg-aligned; sum(axis=0) is pure
        # VPU adds (no XLU), giving a lane-dense (8, 128) partial that hides under DMA.
        o_ref[...] += d.reshape(row_tile // 8, 8, _LANE).sum(axis=0)[None]

    return kernel


def mae_pallas(outputs, target):
    """MAE * 1000 over all elements; the |diff| reduction runs in a Pallas kernel."""
    assert outputs.shape == target.shape
    n = outputs.size

    x = outputs.reshape(-1)
    y = target.reshape(-1)

    # Only pad when the element count is not lane-aligned (pads < 128 elements; the
    # zero pad contributes |0-0| = 0).  The common case does no host-side copy at all.
    rem = n % _LANE
    if rem:
        pad = _LANE - rem
        x = jnp.pad(x, (0, pad))
        y = jnp.pad(y, (0, pad))

    rows = x.size // _LANE
    x2 = x.reshape(rows, _LANE)
    y2 = y.reshape(rows, _LANE)

    # Row tile: as large as possible (HBM-BW bound), capped so 2 inputs x 2 pipeline
    # buffers stay well inside scoped VMEM on every chip, shrunk for small inputs.
    row_tile = min(_MAX_ROW_TILE, _round_up(pl.cdiv(rows, _NUM_CORES), 8))
    nb_total = pl.cdiv(rows, row_tile)
    blocks_per_core = pl.cdiv(rows, _NUM_CORES * row_tile)

    # Clamp to the last real block so the DMA never reads out of range; clamped
    # duplicate blocks are fully masked out inside the kernel.
    def in_idx(c, i):
        return (jnp.minimum(c * blocks_per_core + i, nb_total - 1), 0)

    partials = pl.pallas_call(
        _make_mae_kernel(rows, row_tile, blocks_per_core),
        out_shape=jax.ShapeDtypeStruct((_NUM_CORES, 8, _LANE), jnp.float32),
        grid=(_NUM_CORES, blocks_per_core),
        in_specs=[
            pl.BlockSpec((row_tile, _LANE), in_idx),
            pl.BlockSpec((row_tile, _LANE), in_idx),
        ],
        # One resident (1, 8, 128) accumulator block per core.
        out_specs=pl.BlockSpec((1, 8, _LANE), lambda c, i: (c, 0, 0)),
        compiler_params=pltpu.CompilerParams(
            dimension_semantics=("parallel", "arbitrary"),
            vmem_limit_bytes=32 * 1024 * 1024,
        ),
    )(x2, y2)

    # Single final cross-lane reduce (tiny) + mean + scale.
    abs_sum = jnp.sum(partials)
    return (abs_sum / jnp.float32(n)) * jnp.float32(1000.0)


if __name__ == "__main__":
    # Deterministic example inputs: NCHW depth-style tensors.
    key = jax.random.PRNGKey(0)
    k1, k2 = jax.random.split(key)
    B, C, H, W = 2, 4, 16, 16
    outputs = jax.random.uniform(k1, (B, C, H, W), dtype=jnp.float32)
    target = jax.random.uniform(k2, (B, C, H, W), dtype=jnp.float32)

    result = mae_pallas(outputs, target)
    result = jax.block_until_ready(result)

    # sanity check against plain-JAX reference
    ref = jnp.mean(jnp.abs(outputs - target)) * 1000.0
    assert jnp.allclose(result, ref, rtol=1e-5, atol=1e-4), (result, ref)

    print("KERNEL_OK")
</pallas_src>

<mosaic_0001>
module attributes {stable_mosaic.version = 11 : i64} {
  func.func @kernel(%arg0: i32, %arg1: i32, %arg2: memref<8x128xf32, #tpu.memory_space<vmem>>, %arg3: memref<8x128xf32, #tpu.memory_space<vmem>>, %arg4: memref<1x8x128xf32, #tpu.memory_space<vmem>>) attributes {dimension_semantics = [#tpu.dimension_semantics<parallel>, #tpu.dimension_semantics<arbitrary>], iteration_bounds = array<i64: 2, 1>, scalar_prefetch = 0 : i64, scratch_operands = 0 : i64, tpu.core_type = #tpu.core_type<tc>, window_params = [{transform_indices = @transform_0, window_bounds = array<i64: 8, 128>}, {transform_indices = @transform_1, window_bounds = array<i64: 8, 128>}, {transform_indices = @transform_2, window_bounds = array<i64: 1, 8, 128>}]} {
    %c0_i32 = arith.constant 0 : i32
    %0 = arith.cmpi eq, %arg1, %c0_i32 : i32
    %1 = arith.extui %0 : i1 to i32
    %c0_i32_0 = arith.constant 0 : i32
    %2 = arith.cmpi ne, %1, %c0_i32_0 : i32
    scf.if %2 {
      %cst_11 = arith.constant 0.000000e+00 : f32
      %23 = vector.broadcast %cst_11 : f32 to vector<1x8x128xf32>
      %c0_12 = arith.constant 0 : index
      %c0_13 = arith.constant 0 : index
      %c0_14 = arith.constant 0 : index
      %24 = vector.load %arg4[%c0_12, %c0_13, %c0_14] : memref<1x8x128xf32, #tpu.memory_space<vmem>>, vector<1x8x128xf32>
      tpu.vector_store %arg4[%c0_12, %c0_13, %c0_14], %23 {strides = array<i32>} : memref<1x8x128xf32, #tpu.memory_space<vmem>>, vector<1x8x128xf32>,
    } else {
    }
    %c1_i32 = arith.constant 1 : i32
    %3 = arith.muli %arg0, %c1_i32 : i32
    %4 = arith.addi %3, %arg1 : i32
    %c8_i32 = arith.constant 8 : i32
    %5 = arith.muli %4, %c8_i32 : i32
    %6 = tpu.iota {dimensions = array<i32: 0>} : vector<8x128xi32>
    %7 = vector.broadcast %5 : i32 to vector<8x128xi32>
    %8 = arith.addi %7, %6 : vector<8x128xi32>
    %c16_i32 = arith.constant 16 : i32
    %9 = vector.broadcast %c16_i32 : i32 to vector<8x128xi32>
    %10 = arith.cmpi slt, %8, %9 : vector<8x128xi32>
    %c0 = arith.constant 0 : index
    %c0_1 = arith.constant 0 : index
    %11 = vector.load %arg2[%c0, %c0_1] : memref<8x128xf32, #tpu.memory_space<vmem>>, vector<8x128xf32>
    %c0_2 = arith.constant 0 : index
    %c0_3 = arith.constant 0 : index
    %12 = vector.load %arg3[%c0_2, %c0_3] : memref<8x128xf32, #tpu.memory_space<vmem>>, vector<8x128xf32>
    %13 = arith.subf %11, %12 : vector<8x128xf32>
    %14 = math.absf %13 : vector<8x128xf32>
    %cst = arith.constant 0.000000e+00 : f32
    %15 = vector.broadcast %cst : f32 to vector<8x128xf32>
    %16 = arith.select %10, %14, %15 : vector<8x128xi1>, vector<8x128xf32>
    %c0_4 = arith.constant 0 : index
    %c0_5 = arith.constant 0 : index
    %c0_6 = arith.constant 0 : index
    %17 = vector.load %arg4[%c0_4, %c0_5, %c0_6] : memref<1x8x128xf32, #tpu.memory_space<vmem>>, vector<1x8x128xf32>
    %18 = vector.shape_cast %16 : vector<8x128xf32> to vector<1x8x128xf32>
    %cst_7 = arith.constant dense<0.000000e+00> : vector<8x128xf32>
    %19 = vector.multi_reduction <add>, %18, %cst_7 [0] : vector<1x8x128xf32> to vector<8x128xf32>
    %20 = vector.shape_cast %19 : vector<8x128xf32> to vector<1x8x128xf32>
    %21 = arith.addf %17, %20 : vector<1x8x128xf32>
    %c0_8 = arith.constant 0 : index
    %c0_9 = arith.constant 0 : index
    %c0_10 = arith.constant 0 : index
    %22 = vector.load %arg4[%c0_8, %c0_9, %c0_10] : memref<1x8x128xf32, #tpu.memory_space<vmem>>, vector<1x8x128xf32>
    tpu.vector_store %arg4[%c0_8, %c0_9, %c0_10], %21 {strides = array<i32>} : memref<1x8x128xf32, #tpu.memory_space<vmem>>, vector<1x8x128xf32>,
    return
  }
  func.func @transform_0(%arg0: i32, %arg1: i32) -> (i32, i32) {
    %c1_i32 = arith.constant 1 : i32
    %0 = arith.muli %arg0, %c1_i32 : i32
    %1 = arith.addi %0, %arg1 : i32
    %c1_i32_0 = arith.constant 1 : i32
    %2 = arith.minsi %1, %c1_i32_0 : i32
    %c0_i32 = arith.constant 0 : i32
    %c0_i32_1 = arith.constant 0 : i32
    return %2, %c0_i32 : i32, i32
  }
  func.func @transform_1(%arg0: i32, %arg1: i32) -> (i32, i32) {
    %c1_i32 = arith.constant 1 : i32
    %0 = arith.muli %arg0, %c1_i32 : i32
    %1 = arith.addi %0, %arg1 : i32
    %c1_i32_0 = arith.constant 1 : i32
    %2 = arith.minsi %1, %c1_i32_0 : i32
    %c0_i32 = arith.constant 0 : i32
    %c0_i32_1 = arith.constant 0 : i32
    return %2, %c0_i32 : i32, i32
  }
  func.func @transform_2(%arg0: i32, %arg1: i32) -> (i32, i32, i32) {
    %c0_i32 = arith.constant 0 : i32
    %c0_i32_0 = arith.constant 0 : i32
    %c0_i32_1 = arith.constant 0 : i32
    return %arg0, %c0_i32, %c0_i32_0 : i32, i32, i32
  }
}

</mosaic_0001>

<llo_original>
// kernel: tpu_custom_call.1
$region0: #{tpu_custom_call.1}
  #allocation0 [shape = 'u32[]', space=smem, size = 0x4, offset = 0x4, fixed_abs, tag = 'smem constant byte address 0x4 - core index']
  #allocation1 [shape = 'u32[144,128]{1,0:T(1,128)}', space=vmem, size = 0x12000, scoped, tag = 'internal scratch']
  %s0 = inlined_call_operand.hbm [shape: f32[16,128], index: 0, kind: input, shape index: {}]
  %s1 = inlined_call_operand.hbm [shape: f32[16,128], index: 1, kind: input, shape index: {}]
  %s2 = inlined_call_operand.hbm [shape: f32[2,8,128], index: 2, kind: output, shape index: {}]
  %s3 = sld [smem:[#allocation0]]
  $region53: #{tpu_custom_call.1} parent=0
    _
  %s5 = ssub.s32 1, %s3
  %s6 = scalar_select 0, %s5, %s3
  $region1: #{tpu_custom_call.1} parent=0
    #allocation2 [shape = 'u8[8192]{0}', space=vmem, size = 0x2000, scoped, tag = 'input window, operand 0']
    #allocation3 [shape = 's32[2]{0}', space=sflag, size = 0x8, scoped, tag = 'scoped memory for tpu_custom_call.1']
    #allocation4 [shape = 's32[2]{0}', space=sflag, size = 0x8, scoped, tag = 'scoped memory for tpu_custom_call.1']
    #allocation5 [shape = 'u8[8192]{0}', space=vmem, size = 0x2000, scoped, tag = 'input window, operand 1']
    #allocation6 [shape = 's32[2]{0}', space=sflag, size = 0x8, scoped, tag = 'scoped memory for tpu_custom_call.1']
    #allocation7 [shape = 'u8[8192]{0}', space=vmem, size = 0x2000, scoped, tag = 'output window, operand 0']
    %7 = vsyncpa [#allocation3], 0
    %s8 = scalar_lea.sflag [#allocation3], 1
    %9 = vsyncpa %s8, 0
    %10 = vsyncpa [#allocation6], 0
    %s11 = scalar_lea.sflag [#allocation6], 1
    %12 = vsyncpa %s11, 0
    %13 = vsyncpa [#allocation4], 0
    %s14 = scalar_lea.sflag [#allocation4], 1
    %15 = vsyncpa %s14, 0
    loop: start=0, step=1, limit=4
    $region2: #{tpu_custom_call.1} parent=1 // loop_pre_header
      _
    $region3: #{tpu_custom_call.1} parent=1 // loop_header
      %s17 = sphi 0, %s21
      %p18 = scmp.ge.s32.totalorder %s17, 4
      %s24 = sphi 0, %s36
      %s25 = sphi 0, %s32
      %s26 = sphi 0, %s24
      %s27 = sphi 0, %s25
      %s28 = sphi 0, %s26
      %s29 = sphi 0, %s27
      %s45 = sphi 0, %s47
      %s48 = sphi 0, %s45
      %s49 = sphi 0, %s48
      %s65 = sphi 0, %s49
      %s77 = sphi 0, %s79
      %s80 = sphi 0, %s77
      %s81 = sphi 0, %s80
      %s97 = sphi 0, %s81
      %s103 = sphi 0, %s105
      %s106 = sphi 0, %s103
      %s107 = sphi 0, %s106
      %s123 = sphi 0, %s107
    $region4: #{tpu_custom_call.1} parent=1 // loop_header_branch
      %20 = sbr.rel (%p18) target = $region8
    $region5: #{tpu_custom_call.1} parent=1 // loop_body
      %s22 = ssub.s32 %s17, 1
      %s23 = ssub.s32 %s17, 2
      %s30 = sadd.s32 1, %s25
      %p31 = scmp.ge.s32.totalorder %s30, 1
      %s32 = scalar_select %p31, 0, %s30
      %s33 = sadd.s32 1, %s24
      %s34 = scalar_select %p31, %s33, %s24
      %p35 = scmp.ge.s32.totalorder %s34, 2
      %s36 = scalar_select %p35, 0, %s34
      %s37 = sadd.s32 %s24, %s25
      %p38 = scmp.lt.s32.totalorder %s37, 1
      %s39 = scalar_select %p38, %s37, 1
      %s40 = sadd.s32 %s36, %s32
      %p41 = scmp.lt.s32.totalorder %s40, 1
      %s42 = scalar_select %p41, %s40, 1
      %s43 = ssub.s32 %s39, %s42
      %p44 = scmp.eq.s32.totalorder %s43, 0
      %s46 = sadd.s32 %s45, 1
      %s47 = scalar_select %p44, %s45, %s46
      %p50 = pneg %p44
      %p51 = scmp.eq.s32.totalorder %s17, 1
      %p52 = por %p50, %p51
      %p53 = scmp.ne.s32.totalorder %s45, %s48
      %p54 = scmp.eq.s32.totalorder %s17, 0
      %p55 = por %p53, %p54
      %p56 = scmp.ne.s32.totalorder %s45, %s48
      %p57 = scmp.eq.s32.totalorder %s22, 1
      %p58 = por %p56, %p57
      %p59 = scmp.ne.s32.totalorder %s48, %s49
      %p60 = scmp.eq.s32.totalorder %s22, 0
      %p61 = por %p59, %p60
      %p62 = scmp.ne.s32.totalorder %s48, %s49
      %p63 = scmp.eq.s32.totalorder %s23, 1
      %p64 = por %p62, %p63
      %p66 = scmp.ne.s32.totalorder %s49, %s65
      %p67 = scmp.eq.s32.totalorder %s23, 0
      %p68 = por %p66, %p67
      %s69 = sadd.s32 %s24, %s25
      %p70 = scmp.lt.s32.totalorder %s69, 1
      %s71 = scalar_select %p70, %s69, 1
      %s72 = sadd.s32 %s36, %s32
      %p73 = scmp.lt.s32.totalorder %s72, 1
      %s74 = scalar_select %p73, %s72, 1
      %s75 = ssub.s32 %s71, %s74
      %p76 = scmp.eq.s32.totalorder %s75, 0
      %s78 = sadd.s32 %s77, 1
      %s79 = scalar_select %p76, %s77, %s78
      %p82 = pneg %p76
      %p83 = scmp.eq.s32.totalorder %s17, 1
      %p84 = por %p82, %p83
      %p85 = scmp.ne.s32.totalorder %s77, %s80
      %p86 = scmp.eq.s32.totalorder %s17, 0
      %p87 = por %p85, %p86
      %p88 = scmp.ne.s32.totalorder %s77, %s80
      %p89 = scmp.eq.s32.totalorder %s22, 1
      %p90 = por %p88, %p89
      %p91 = scmp.ne.s32.totalorder %s80, %s81
      %p92 = scmp.eq.s32.totalorder %s22, 0
      %p93 = por %p91, %p92
      %p94 = scmp.ne.s32.totalorder %s80, %s81
      %p95 = scmp.eq.s32.totalorder %s23, 1
      %p96 = por %p94, %p95
      %p98 = scmp.ne.s32.totalorder %s81, %s97
      %p99 = scmp.eq.s32.totalorder %s23, 0
      %p100 = por %p98, %p99
      %s101 = ssub.s32 %s24, %s36
      %p102 = scmp.eq.s32.totalorder %s101, 0
      %s104 = sadd.s32 %s103, 1
      %s105 = scalar_select %p102, %s103, %s104
      %p108 = pneg %p102
      %p109 = scmp.eq.s32.totalorder %s17, 1
      %p110 = por %p108, %p109
      %p111 = scmp.ne.s32.totalorder %s103, %s106
      %p112 = scmp.eq.s32.totalorder %s17, 0
      %p113 = por %p111, %p112
      %p114 = scmp.ne.s32.totalorder %s103, %s106
      %p115 = scmp.eq.s32.totalorder %s22, 1
      %p116 = por %p114, %p115
      %p117 = scmp.ne.s32.totalorder %s106, %s107
      %p118 = scmp.eq.s32.totalorder %s22, 0
      %p119 = por %p117, %p118
      %p120 = scmp.ne.s32.totalorder %s106, %s107
      %p121 = scmp.eq.s32.totalorder %s23, 1
      %p122 = por %p120, %p121
      %p124 = scmp.ne.s32.totalorder %s107, %s123
      %p125 = scmp.eq.s32.totalorder %s23, 0
      %p126 = por %p124, %p125
      %p127 = scmp.le.s32.totalorder 1, %s17
      %p128 = scmp.lt.s32.totalorder %s17, 3
      %p129 = pnand %p127, %p128
      %p130 = pneg %p129
      // Predicated region
      $region9: #{tpu_custom_call.1} parent=5 // pred_check
        _
      $region10: #{tpu_custom_call.1} parent=5 // pred_check_branch
        %132 = sbr.rel (%p129) target = $region12
      $region11: #{tpu_custom_call.1} parent=5 // pred_region
        %s133 = ssub.s32 %s17, 1
      $region12: #{tpu_custom_call.1} parent=5 // pred_fallthru
        _
      %p134 = scmp.lt.s32.totalorder %s17, 2
      // Predicated region
      $region13: #{tpu_custom_call.1} parent=5 // pred_check
        %p135 = pneg %p134
      $region14: #{tpu_custom_call.1} parent=5 // pred_check_branch
        %137 = sbr.rel (%p135) target = $region16
      $region15: #{tpu_custom_call.1} parent=5 // pred_region
        // Predicated region
        $region17: #{tpu_custom_call.1} parent=15 // pred_check
          %p138 = pneg %p55
        $region18: #{tpu_custom_call.1} parent=15 // pred_check_branch
          %140 = sbr.rel (%p138) target = $region20
        $region19: #{tpu_custom_call.1} parent=15 // pred_region
          %s141 = sand.u32 %s45, 1
          %s142 = scalar_lea.sflag [#allocation3], %s141
          %s143 = sand.u32 %s45, 1
          %s144 = smul.addr %s143, 8
          %s145 = scalar_lea.vmem [#allocation2], %s144
          %s146 = sadd.s32 %s24, %s25
          %p147 = scmp.lt.s32.totalorder %s146, 1
          %s148 = scalar_select %p147, %s146, 1
          %s150 = ssub.s32 128, 128
          %151 = vsyncadd %s142, %s150
          %s152 = smul.addr %s148, 128
          %s153 = scalar_lea.hbm %s0, %s152
          %s155 = sshll.u32 %s145, 4
          %s156 = int_to_ptr.vmem [resolvable:$true] %s155
          %158 = dma.hbm_to_vmem [thread:$0]  %s153, 128, %s156, %s142
        $region20: #{tpu_custom_call.1} parent=15 // pred_fallthru
          _
        // Predicated region
        $region21: #{tpu_custom_call.1} parent=15 // pred_check
          %p159 = pneg %p87
        $region22: #{tpu_custom_call.1} parent=15 // pred_check_branch
          %161 = sbr.rel (%p159) target = $region24
        $region23: #{tpu_custom_call.1} parent=15 // pred_region
          %s162 = sand.u32 %s77, 1
          %s163 = scalar_lea.sflag [#allocation6], %s162
          %s164 = sand.u32 %s77, 1
          %s165 = smul.addr %s164, 8
          %s166 = scalar_lea.vmem [#allocation5], %s165
          %s167 = sadd.s32 %s24, %s25
          %p168 = scmp.lt.s32.totalorder %s167, 1
          %s169 = scalar_select %p168, %s167, 1
          %s171 = ssub.s32 128, 128
          %172 = vsyncadd %s163, %s171
          %s173 = smul.addr %s169, 128
          %s174 = scalar_lea.hbm %s1, %s173
          %s176 = sshll.u32 %s166, 4
          %s177 = int_to_ptr.vmem [resolvable:$true] %s176
          %179 = dma.hbm_to_vmem [thread:$0]  %s174, 128, %s177, %s163
        $region24: #{tpu_custom_call.1} parent=15 // pred_fallthru
          _
      $region16: #{tpu_custom_call.1} parent=5 // pred_fallthru
        _
      %p180 = scmp.le.s32.totalorder 1, %s17
      %p181 = scmp.lt.s32.totalorder %s17, 3
      %p182 = pnand %p180, %p181
      %p183 = pneg %p182
      // Predicated region
      $region25: #{tpu_custom_call.1} parent=5 // pred_check
        _
      $region26: #{tpu_custom_call.1} parent=5 // pred_check_branch
        %185 = sbr.rel (%p182) target = $region28
      $region27: #{tpu_custom_call.1} parent=5 // pred_region
        %s186 = ssub.s32 %s17, 1
        %s187 = sand.u32 %s48, 1
        %s188 = scalar_lea.sflag [#allocation3], %s187
        %s189 = sand.u32 %s48, 1
        %s190 = smul.addr %s189, 8
        %s191 = scalar_lea.vmem [#allocation2], %s190
        // Predicated region
        $region29: #{tpu_custom_call.1} parent=27 // pred_check
          %p192 = pneg %p61
        $region30: #{tpu_custom_call.1} parent=27 // pred_check_branch
          %194 = sbr.rel (%p192) target = $region32
        $region31: #{tpu_custom_call.1} parent=27 // pred_region
          %195 = dma.done %s188, 128
        $region32: #{tpu_custom_call.1} parent=27 // pred_fallthru
          _
        %s196 = sand.u32 %s80, 1
        %s197 = scalar_lea.sflag [#allocation6], %s196
        %s198 = sand.u32 %s80, 1
        %s199 = smul.addr %s198, 8
        %s200 = scalar_lea.vmem [#allocation5], %s199
        // Predicated region
        $region33: #{tpu_custom_call.1} parent=27 // pred_check
          %p201 = pneg %p93
        $region34: #{tpu_custom_call.1} parent=27 // pred_check_branch
          %203 = sbr.rel (%p201) target = $region36
        $region35: #{tpu_custom_call.1} parent=27 // pred_region
          %204 = dma.done %s197, 128
        $region36: #{tpu_custom_call.1} parent=27 // pred_fallthru
          _
        %s205 = sand.u32 %s48, 1
        %s206 = scalar_lea.sflag [#allocation3], %s205
        %s207 = sand.u32 %s48, 1
        %s208 = smul.addr %s207, 8
        %s209 = scalar_lea.vmem [#allocation2], %s208
        %p210 = pneg %p61
        %p211 = pneg %p58
        %s212 = sand.u32 %s80, 1
        %s213 = scalar_lea.sflag [#allocation6], %s212
        %s214 = sand.u32 %s80, 1
        %s215 = smul.addr %s214, 8
        %s216 = scalar_lea.vmem [#allocation5], %s215
        %p217 = pneg %p93
        %p218 = pneg %p90
        %p219 = pneg %p119
        %p220 = pneg %p116
        %s221 = sand.u32 %s106, 1
        %s222 = scalar_lea.sflag [#allocation4], %s221
        %s223 = sand.u32 %s106, 1
        %s224 = smul.addr %s223, 8
        %s225 = scalar_lea.vmem [#allocation7], %s224
        %s226 = sadd.s32 %s26, %s27
        %p227 = scmp.lt.s32.totalorder %s226, 1
        %s228 = scalar_select %p227, %s226, 1
        %s229 = sadd.s32 %s26, %s27
        %p230 = scmp.lt.s32.totalorder %s229, 1
        %s231 = scalar_select %p230, %s229, 1
        %p232 = scmp.eq.s32.totalorder %s27, 0
        // Predicated region
        $region37: #{tpu_custom_call.1} parent=27 // pred_check
          %p233 = pneg %p232
        $region38: #{tpu_custom_call.1} parent=27 // pred_check_branch
          %235 = sbr.rel (%p233) target = $region40
        $region39: #{tpu_custom_call.1} parent=27 // pred_region
          %236 = vst [vmem:[%s225] sm:$0xff] 0.0
        $region40: #{tpu_custom_call.1} parent=27 // pred_fallthru
          _
        %s237 = sadd.s32 %s26, %s27
        %s238 = smul.u32 %s237, 8
        %v239 = vlaneseq
        %v240 = vshrl.u32 %v239, 7
        %v241 = vstv %s238
        %v242 = vadd.s32 %v241, %v240
        %vm243 = vcmp.lt.s32.totalorder %v242, 16
        %v244 = vld [vmem:[%s191] sm:$0xff]
        %v245 = vld [vmem:[%s200] sm:$0xff]
        %v246 = vsub.f32 %v244, %v245
        %v247 = vand.u32 2147483647, %v246
        %v248 = vsel %vm243, %v247, 0.0
        %v249 = vld [vmem:[%s225] sm:$0xff]
        %v250 = vadd.f32 %v248, 0.0
        %v251 = vadd.f32 %v249, %v250
        %252 = vst [vmem:[%s225] sm:$0xff] %v251
        %s253 = sand.u32 %s106, 1
        %s254 = scalar_lea.sflag [#allocation4], %s253
        %s255 = sand.u32 %s106, 1
        %s256 = smul.addr %s255, 8
        %s257 = scalar_lea.vmem [#allocation7], %s256
        // Predicated region
        $region41: #{tpu_custom_call.1} parent=27 // pred_check
          %p258 = pneg %p116
        $region42: #{tpu_custom_call.1} parent=27 // pred_check_branch
          %260 = sbr.rel (%p258) target = $region44
        $region43: #{tpu_custom_call.1} parent=27 // pred_region
          %s262 = ssub.s32 128, 128
          %263 = vsyncadd %s254, %s262
          %s264 = smul.addr %s26, 128
          %s265 = scalar_lea.hbm %s2, %s264
          %s267 = sshll.u32 %s257, 4
          %s268 = int_to_ptr.vmem [resolvable:$true] %s267
          %270 = dma.vmem_to_hbm [thread:$0]  %s268, 128, %s265, %s254
        $region44: #{tpu_custom_call.1} parent=27 // pred_fallthru
          _
      $region28: #{tpu_custom_call.1} parent=5 // pred_fallthru
        _
      %p271 = scmp.le.s32.totalorder 2, %s17
      // Predicated region
      $region45: #{tpu_custom_call.1} parent=5 // pred_check
        %p272 = pneg %p271
      $region46: #{tpu_custom_call.1} parent=5 // pred_check_branch
        %274 = sbr.rel (%p272) target = $region48
      $region47: #{tpu_custom_call.1} parent=5 // pred_region
        %s275 = ssub.s32 %s17, 2
        // Predicated region
        $region49: #{tpu_custom_call.1} parent=47 // pred_check
          %p276 = pneg %p122
        $region50: #{tpu_custom_call.1} parent=47 // pred_check_branch
          %278 = sbr.rel (%p276) target = $region52
        $region51: #{tpu_custom_call.1} parent=47 // pred_region
          %s279 = sand.u32 %s107, 1
          %s280 = scalar_lea.sflag [#allocation4], %s279
          %s281 = sand.u32 %s107, 1
          %s282 = smul.addr %s281, 8
          %s283 = scalar_lea.vmem [#allocation7], %s282
          %284 = dma.done %s280, 128
        $region52: #{tpu_custom_call.1} parent=47 // pred_fallthru
          _
      $region48: #{tpu_custom_call.1} parent=5 // pred_fallthru
        _
    $region6: #{tpu_custom_call.1} parent=1 // loop_footer
      %s21 = sadd.s32 1, %s17
    $region7: #{tpu_custom_call.1} parent=1 // loop_footer_branch
      %16 = sbr.rel target = $region3
    $region8: #{tpu_custom_call.1} parent=1 // loop_exit
      _
    %285 = vsyncpa [#allocation3], 1
    %s286 = scalar_lea.sflag [#allocation3], 1
    %287 = vsyncpa %s286, 1
    %288 = vsyncpa [#allocation6], 1
    %s289 = scalar_lea.sflag [#allocation6], 1
    %290 = vsyncpa %s289, 1
    %291 = vsyncpa [#allocation4], 1
    %s292 = scalar_lea.sflag [#allocation4], 1
    %293 = vsyncpa %s292, 1

</llo_original>
